<compile_context>
chip_gen: v5e
topology: v5e:2x2
jax: 0.10.0
libtpu: 0.0.40
codegen_flags: <defaults>
</compile_context>

<pallas_src>
import functools

import jax
import jax.numpy as jnp
from jax import lax
from jax.experimental import pallas as pl
from jax.experimental.pallas import tpu as pltpu


# ----------------------------------------------------------------------------
# Fused kernel: whole problem in VMEM, no grid (working set ~10 KB).
#   x:     (B, L, D)
#   wqkv:  (D, 3*H*Hs)   columns ordered [Q heads | K heads | V heads],
#                        head h occupying cols [h*Hs:(h+1)*Hs] of its block
#   wproj: (H*Hs, Dout)
#   bproj: (1, Dout)
#   out:   (B, L, Dout)
# ----------------------------------------------------------------------------
def _fused_mha_kernel(x_ref, wqkv_ref, wproj_ref, bproj_ref, o_ref, *,
                      num_heads, head_size):
    x = x_ref[...].astype(jnp.float32)            # (B, L, D)
    wqkv = wqkv_ref[...].astype(jnp.float32)      # (D, 3*H*Hs)
    wproj = wproj_ref[...].astype(jnp.float32)    # (H*Hs, Dout)
    bproj = bproj_ref[...].astype(jnp.float32)    # (1, Dout)

    B, L, _ = x.shape
    hhs = num_heads * head_size

    # Single stacked QKV projection: one matmul at lane width 3*H*Hs instead of
    # 3*H matmuls at lane width Hs.
    qkv = lax.dot_general(
        x, wqkv, dimension_numbers=(((2,), (0,)), ((), ())),
        preferred_element_type=jnp.float32)       # (B, L, 3*H*Hs)
    q = qkv[:, :, 0:hhs]
    k = qkv[:, :, hhs:2 * hhs]
    v = qkv[:, :, 2 * hhs:3 * hhs]

    # Causal mask: built once for all batches and heads.
    row = lax.broadcasted_iota(jnp.int32, (L, L), 0)
    col = lax.broadcasted_iota(jnp.int32, (L, L), 1)
    causal = (row >= col)[None, :, :]             # (1, L, L), broadcasts over B
    scale = jnp.float32(head_size) ** jnp.float32(-0.5)
    neg_inf = jnp.float32(-jnp.inf)

    # Per-head attention.  The output projection is accumulated head-by-head,
    # which equals concat(heads, -1) @ wproj and avoids a lane concat/relayout.
    # All head slices are static -> free.
    y = jnp.zeros((B, L, wproj.shape[1]), dtype=jnp.float32)
    for h in range(num_heads):
        lo, hi = h * head_size, (h + 1) * head_size
        qh = q[:, :, lo:hi]                       # (B, L, Hs)
        kh = k[:, :, lo:hi]
        vh = v[:, :, lo:hi]

        # q @ k^T batched over B, contracting dim 2 vs 2 (no explicit k.T).
        s = lax.dot_general(
            qh, kh, dimension_numbers=(((2,), (2,)), ((0,), (0,))),
            preferred_element_type=jnp.float32) * scale        # (B, L, L)
        s = jnp.where(causal, s, neg_inf)

        # softmax over last axis (every row has its diagonal unmasked).
        m = jnp.max(s, axis=-1, keepdims=True)
        p = jnp.exp(s - m)
        att = p * pl.reciprocal(jnp.sum(p, axis=-1, keepdims=True), approx=True)

        oh = lax.dot_general(
            att, vh, dimension_numbers=(((2,), (1,)), ((0,), (0,))),
            preferred_element_type=jnp.float32)                 # (B, L, Hs)

        # (B, L, Hs) @ (Hs, Dout) accumulated into projection output.
        y = y + lax.dot_general(
            oh, wproj[lo:hi, :], dimension_numbers=(((2,), (0,)), ((), ())),
            preferred_element_type=jnp.float32)

    y = y + bproj[None, :, :]                                    # (B, L, Dout)
    # TODO(synk): dropout is identity (eval mode); pltpu.prng_random_bits could
    # implement stochastic dropout if training behaviour is required.
    o_ref[...] = y.astype(o_ref.dtype)


def multiheads_forward(x, wq, wk, wv, w_proj, b_proj):
    """
    x:        (B, L, D)
    wq/wk/wv: (H, D, Hs)  per-head projection weights, (in, out) layout
    w_proj:   (H*Hs, Dout)
    b_proj:   (Dout,)
    returns:  (B, L, Dout)
    """
    B, L, D = x.shape
    H, _, Hs = wq.shape
    Dout = w_proj.shape[1]

    # Stack per-head weights so head h occupies columns [h*Hs:(h+1)*Hs]
    # (matches torch.cat head order), then fuse Q/K/V into one (D, 3*H*Hs).
    def _stack(w):                                 # (H, D, Hs) -> (D, H*Hs)
        return jnp.transpose(w, (1, 0, 2)).reshape(D, H * Hs)

    w_qkv = jnp.concatenate([_stack(wq), _stack(wk), _stack(wv)], axis=1)

    kernel = functools.partial(_fused_mha_kernel, num_heads=H, head_size=Hs)
    vmem = pltpu.MemorySpace.VMEM
    return pl.pallas_call(
        kernel,
        out_shape=jax.ShapeDtypeStruct((B, L, Dout), jnp.float32),
        in_specs=[
            pl.BlockSpec(memory_space=vmem),       # x
            pl.BlockSpec(memory_space=vmem),       # w_qkv
            pl.BlockSpec(memory_space=vmem),       # w_proj
            pl.BlockSpec(memory_space=vmem),       # b_proj
        ],
        out_specs=pl.BlockSpec(memory_space=vmem),
    )(x, w_qkv, w_proj, b_proj.reshape(1, Dout))


# ----------------------------------------------------------------------------
# Pure-JAX reference for a sanity check
# ----------------------------------------------------------------------------
def _reference(x, wq, wk, wv, w_proj, b_proj):
    B, L, D = x.shape
    H, _, Hs = wq.shape
    outs = []
    mask = jnp.tril(jnp.ones((L, L), dtype=bool))
    for h in range(H):
        q = x @ wq[h]
        k = x @ wk[h]
        v = x @ wv[h]
        s = (q @ jnp.swapaxes(k, -2, -1)) * (Hs ** -0.5)
        s = jnp.where(mask, s, -jnp.inf)
        att = jax.nn.softmax(s, axis=-1)
        outs.append(att @ v)
    cat = jnp.concatenate(outs, axis=-1)
    return cat @ w_proj + b_proj


if __name__ == "__main__":
    # Module hyperparameters
    number_of_heads = 4
    d_model = 32
    d_att_weigh = 32
    seq_len = 8
    head_size = d_att_weigh // number_of_heads   # 8

    B, L = 2, seq_len

    key = jax.random.PRNGKey(0)
    kx, kq, kk, kv, kw, kb = jax.random.split(key, 6)

    x = jax.random.normal(kx, (B, L, d_model), dtype=jnp.float32)

    # Deterministic synthetic weights in (in, out) layout.
    wq = 0.1 * jax.random.normal(kq, (number_of_heads, d_model, head_size), jnp.float32)
    wk = 0.1 * jax.random.normal(kk, (number_of_heads, d_model, head_size), jnp.float32)
    wv = 0.1 * jax.random.normal(kv, (number_of_heads, d_model, head_size), jnp.float32)
    w_proj = 0.1 * jax.random.normal(kw, (number_of_heads * head_size, d_att_weigh), jnp.float32)
    b_proj = 0.1 * jax.random.normal(kb, (d_att_weigh,), jnp.float32)

    out = multiheads_forward(x, wq, wk, wv, w_proj, b_proj)
    out = jax.block_until_ready(out)

    ref = _reference(x, wq, wk, wv, w_proj, b_proj)
    assert out.shape == (B, L, d_att_weigh)
    # Tolerance loosened slightly: approx=True reciprocal (EUP vrcp) has
    # ~bf16-level relative error in the softmax normalization.
    assert jnp.allclose(out, ref, atol=2e-2, rtol=2e-2), "mismatch vs reference"

    print("KERNEL_OK")
</pallas_src>

<mosaic_0001>
module attributes {stable_mosaic.version = 11 : i64} {
  func.func @_fused_mha_kernel(%arg0: memref<2x8x32xf32, #tpu.memory_space<vmem>>, %arg1: memref<32x96xf32, #tpu.memory_space<vmem>>, %arg2: memref<32x32xf32, #tpu.memory_space<vmem>>, %arg3: memref<1x32xf32, #tpu.memory_space<vmem>>, %arg4: memref<2x8x32xf32, #tpu.memory_space<vmem>>) attributes {dimension_semantics = [], scalar_prefetch = 0 : i64, scratch_operands = 0 : i64, tpu.core_type = #tpu.core_type<tc>} {
    %c0 = arith.constant 0 : index
    %c0_0 = arith.constant 0 : index
    %c0_1 = arith.constant 0 : index
    %0 = vector.load %arg0[%c0, %c0_0, %c0_1] : memref<2x8x32xf32, #tpu.memory_space<vmem>>, vector<2x8x32xf32>
    %c0_2 = arith.constant 0 : index
    %c0_3 = arith.constant 0 : index
    %1 = vector.load %arg1[%c0_2, %c0_3] : memref<32x96xf32, #tpu.memory_space<vmem>>, vector<32x96xf32>
    %c0_4 = arith.constant 0 : index
    %c0_5 = arith.constant 0 : index
    %2 = vector.load %arg2[%c0_4, %c0_5] : memref<32x32xf32, #tpu.memory_space<vmem>>, vector<32x32xf32>
    %c0_6 = arith.constant 0 : index
    %c0_7 = arith.constant 0 : index
    %3 = vector.load %arg3[%c0_6, %c0_7] : memref<1x32xf32, #tpu.memory_space<vmem>>, vector<1x32xf32>
    %cst = arith.constant dense<0.000000e+00> : vector<2x8x96xf32>
    %4 = tpu.matmul %0, %1, %cst {dimension_numbers = #tpu.dot_dimension_numbers<[2], [0], [0, 1], [1], [0, 0, 0, 1, 1, 1], [], []>} : vector<2x8x32xf32>, vector<32x96xf32>, vector<2x8x96xf32> -> vector<2x8x96xf32>
    %5 = vector.extract_strided_slice %4 {offsets = [0, 0, 0], sizes = [2, 8, 32], strides = [1, 1, 1]} : vector<2x8x96xf32> to vector<2x8x32xf32>
    %6 = vector.extract_strided_slice %4 {offsets = [0, 0, 32], sizes = [2, 8, 32], strides = [1, 1, 1]} : vector<2x8x96xf32> to vector<2x8x32xf32>
    %7 = vector.extract_strided_slice %4 {offsets = [0, 0, 64], sizes = [2, 8, 32], strides = [1, 1, 1]} : vector<2x8x96xf32> to vector<2x8x32xf32>
    %8 = tpu.iota {dimensions = array<i32: 0>} : vector<8x8xi32>
    %9 = tpu.iota {dimensions = array<i32: 1>} : vector<8x8xi32>
    %10 = arith.cmpi sge, %8, %9 : vector<8x8xi32>
    %11 = vector.shape_cast %10 : vector<8x8xi1> to vector<1x8x8xi1>
    %cst_8 = arith.constant 8.000000e+00 : f32
    %cst_9 = arith.constant -5.000000e-01 : f32
    %12 = math.powf %cst_8, %cst_9 : f32
    %cst_10 = arith.constant 0.000000e+00 : f32
    %13 = vector.broadcast %cst_10 : f32 to vector<2x8x32xf32>
    %14 = vector.extract_strided_slice %5 {offsets = [0, 0, 0], sizes = [2, 8, 8], strides = [1, 1, 1]} : vector<2x8x32xf32> to vector<2x8x8xf32>
    %15 = vector.extract_strided_slice %6 {offsets = [0, 0, 0], sizes = [2, 8, 8], strides = [1, 1, 1]} : vector<2x8x32xf32> to vector<2x8x8xf32>
    %16 = vector.extract_strided_slice %7 {offsets = [0, 0, 0], sizes = [2, 8, 8], strides = [1, 1, 1]} : vector<2x8x32xf32> to vector<2x8x8xf32>
    %cst_11 = arith.constant dense<0.000000e+00> : vector<2x8x8xf32>
    %17 = tpu.matmul %14, %15, %cst_11 {dimension_numbers = #tpu.dot_dimension_numbers<[2], [2], [1], [1], [0, 0, 0, 1, 1, 1], [0], [0]>} : vector<2x8x8xf32>, vector<2x8x8xf32>, vector<2x8x8xf32> -> vector<2x8x8xf32>
    %18 = vector.broadcast %12 : f32 to vector<2x8x8xf32>
    %19 = arith.mulf %17, %18 : vector<2x8x8xf32>
    %cst_12 = arith.constant 0xFF800000 : f32
    %20 = vector.shape_cast %11 : vector<1x8x8xi1> to vector<1x8x8xi1>
    %21 = vector.broadcast %20 : vector<1x8x8xi1> to vector<2x8x8xi1>
    %22 = vector.broadcast %cst_12 : f32 to vector<2x8x8xf32>
    %23 = arith.select %21, %19, %22 : vector<2x8x8xi1>, vector<2x8x8xf32>
    %cst_13 = arith.constant dense<0xFF800000> : vector<2x8xf32>
    %24 = vector.multi_reduction <maximumf>, %23, %cst_13 [2] : vector<2x8x8xf32> to vector<2x8xf32>
    %25 = vector.shape_cast %24 : vector<2x8xf32> to vector<2x8x1xf32>
    %26 = vector.broadcast %25 : vector<2x8x1xf32> to vector<2x8x8xf32>
    %27 = arith.subf %23, %26 : vector<2x8x8xf32>
    %28 = math.exp %27 : vector<2x8x8xf32>
    %cst_14 = arith.constant dense<0.000000e+00> : vector<2x8xf32>
    %29 = vector.multi_reduction <add>, %28, %cst_14 [2] : vector<2x8x8xf32> to vector<2x8xf32>
    %30 = vector.shape_cast %29 : vector<2x8xf32> to vector<2x8x1xf32>
    %31 = tpu.reciprocal %30 {approx = true} : vector<2x8x1xf32> -> vector<2x8x1xf32>
    %32 = vector.broadcast %31 : vector<2x8x1xf32> to vector<2x8x8xf32>
    %33 = arith.mulf %28, %32 : vector<2x8x8xf32>
    %cst_15 = arith.constant dense<0.000000e+00> : vector<2x8x8xf32>
    %34 = tpu.matmul %33, %16, %cst_15 {dimension_numbers = #tpu.dot_dimension_numbers<[2], [1], [1], [2], [0, 0, 0, 1, 1, 2], [0], [0]>} : vector<2x8x8xf32>, vector<2x8x8xf32>, vector<2x8x8xf32> -> vector<2x8x8xf32>
    %35 = vector.extract_strided_slice %2 {offsets = [0, 0], sizes = [8, 32], strides = [1, 1]} : vector<32x32xf32> to vector<8x32xf32>
    %cst_16 = arith.constant dense<0.000000e+00> : vector<2x8x32xf32>
    %36 = tpu.matmul %34, %35, %cst_16 {dimension_numbers = #tpu.dot_dimension_numbers<[2], [0], [0, 1], [1], [0, 0, 0, 1, 1, 1], [], []>} : vector<2x8x8xf32>, vector<8x32xf32>, vector<2x8x32xf32> -> vector<2x8x32xf32>
    %37 = arith.addf %13, %36 : vector<2x8x32xf32>
    %38 = vector.extract_strided_slice %5 {offsets = [0, 0, 8], sizes = [2, 8, 8], strides = [1, 1, 1]} : vector<2x8x32xf32> to vector<2x8x8xf32>
    %39 = vector.extract_strided_slice %6 {offsets = [0, 0, 8], sizes = [2, 8, 8], strides = [1, 1, 1]} : vector<2x8x32xf32> to vector<2x8x8xf32>
    %40 = vector.extract_strided_slice %7 {offsets = [0, 0, 8], sizes = [2, 8, 8], strides = [1, 1, 1]} : vector<2x8x32xf32> to vector<2x8x8xf32>
    %cst_17 = arith.constant dense<0.000000e+00> : vector<2x8x8xf32>
    %41 = tpu.matmul %38, %39, %cst_17 {dimension_numbers = #tpu.dot_dimension_numbers<[2], [2], [1], [1], [0, 0, 0, 1, 1, 1], [0], [0]>} : vector<2x8x8xf32>, vector<2x8x8xf32>, vector<2x8x8xf32> -> vector<2x8x8xf32>
    %42 = vector.broadcast %12 : f32 to vector<2x8x8xf32>
    %43 = arith.mulf %41, %42 : vector<2x8x8xf32>
    %cst_18 = arith.constant 0xFF800000 : f32
    %44 = vector.shape_cast %11 : vector<1x8x8xi1> to vector<1x8x8xi1>
    %45 = vector.broadcast %44 : vector<1x8x8xi1> to vector<2x8x8xi1>
    %46 = vector.broadcast %cst_18 : f32 to vector<2x8x8xf32>
    %47 = arith.select %45, %43, %46 : vector<2x8x8xi1>, vector<2x8x8xf32>
    %cst_19 = arith.constant dense<0xFF800000> : vector<2x8xf32>
    %48 = vector.multi_reduction <maximumf>, %47, %cst_19 [2] : vector<2x8x8xf32> to vector<2x8xf32>
    %49 = vector.shape_cast %48 : vector<2x8xf32> to vector<2x8x1xf32>
    %50 = vector.broadcast %49 : vector<2x8x1xf32> to vector<2x8x8xf32>
    %51 = arith.subf %47, %50 : vector<2x8x8xf32>
    %52 = math.exp %51 : vector<2x8x8xf32>
    %cst_20 = arith.constant dense<0.000000e+00> : vector<2x8xf32>
    %53 = vector.multi_reduction <add>, %52, %cst_20 [2] : vector<2x8x8xf32> to vector<2x8xf32>
    %54 = vector.shape_cast %53 : vector<2x8xf32> to vector<2x8x1xf32>
    %55 = tpu.reciprocal %54 {approx = true} : vector<2x8x1xf32> -> vector<2x8x1xf32>
    %56 = vector.broadcast %55 : vector<2x8x1xf32> to vector<2x8x8xf32>
    %57 = arith.mulf %52, %56 : vector<2x8x8xf32>
    %cst_21 = arith.constant dense<0.000000e+00> : vector<2x8x8xf32>
    %58 = tpu.matmul %57, %40, %cst_21 {dimension_numbers = #tpu.dot_dimension_numbers<[2], [1], [1], [2], [0, 0, 0, 1, 1, 2], [0], [0]>} : vector<2x8x8xf32>, vector<2x8x8xf32>, vector<2x8x8xf32> -> vector<2x8x8xf32>
    %59 = vector.extract_strided_slice %2 {offsets = [8, 0], sizes = [8, 32], strides = [1, 1]} : vector<32x32xf32> to vector<8x32xf32>
    %cst_22 = arith.constant dense<0.000000e+00> : vector<2x8x32xf32>
    %60 = tpu.matmul %58, %59, %cst_22 {dimension_numbers = #tpu.dot_dimension_numbers<[2], [0], [0, 1], [1], [0, 0, 0, 1, 1, 1], [], []>} : vector<2x8x8xf32>, vector<8x32xf32>, vector<2x8x32xf32> -> vector<2x8x32xf32>
    %61 = arith.addf %37, %60 : vector<2x8x32xf32>
    %62 = vector.extract_strided_slice %5 {offsets = [0, 0, 16], sizes = [2, 8, 8], strides = [1, 1, 1]} : vector<2x8x32xf32> to vector<2x8x8xf32>
    %63 = vector.extract_strided_slice %6 {offsets = [0, 0, 16], sizes = [2, 8, 8], strides = [1, 1, 1]} : vector<2x8x32xf32> to vector<2x8x8xf32>
    %64 = vector.extract_strided_slice %7 {offsets = [0, 0, 16], sizes = [2, 8, 8], strides = [1, 1, 1]} : vector<2x8x32xf32> to vector<2x8x8xf32>
    %cst_23 = arith.constant dense<0.000000e+00> : vector<2x8x8xf32>
    %65 = tpu.matmul %62, %63, %cst_23 {dimension_numbers = #tpu.dot_dimension_numbers<[2], [2], [1], [1], [0, 0, 0, 1, 1, 1], [0], [0]>} : vector<2x8x8xf32>, vector<2x8x8xf32>, vector<2x8x8xf32> -> vector<2x8x8xf32>
    %66 = vector.broadcast %12 : f32 to vector<2x8x8xf32>
    %67 = arith.mulf %65, %66 : vector<2x8x8xf32>
    %cst_24 = arith.constant 0xFF800000 : f32
    %68 = vector.shape_cast %11 : vector<1x8x8xi1> to vector<1x8x8xi1>
    %69 = vector.broadcast %68 : vector<1x8x8xi1> to vector<2x8x8xi1>
    %70 = vector.broadcast %cst_24 : f32 to vector<2x8x8xf32>
    %71 = arith.select %69, %67, %70 : vector<2x8x8xi1>, vector<2x8x8xf32>
    %cst_25 = arith.constant dense<0xFF800000> : vector<2x8xf32>
    %72 = vector.multi_reduction <maximumf>, %71, %cst_25 [2] : vector<2x8x8xf32> to vector<2x8xf32>
    %73 = vector.shape_cast %72 : vector<2x8xf32> to vector<2x8x1xf32>
    %74 = vector.broadcast %73 : vector<2x8x1xf32> to vector<2x8x8xf32>
    %75 = arith.subf %71, %74 : vector<2x8x8xf32>
    %76 = math.exp %75 : vector<2x8x8xf32>
    %cst_26 = arith.constant dense<0.000000e+00> : vector<2x8xf32>
    %77 = vector.multi_reduction <add>, %76, %cst_26 [2] : vector<2x8x8xf32> to vector<2x8xf32>
    %78 = vector.shape_cast %77 : vector<2x8xf32> to vector<2x8x1xf32>
    %79 = tpu.reciprocal %78 {approx = true} : vector<2x8x1xf32> -> vector<2x8x1xf32>
    %80 = vector.broadcast %79 : vector<2x8x1xf32> to vector<2x8x8xf32>
    %81 = arith.mulf %76, %80 : vector<2x8x8xf32>
    %cst_27 = arith.constant dense<0.000000e+00> : vector<2x8x8xf32>
    %82 = tpu.matmul %81, %64, %cst_27 {dimension_numbers = #tpu.dot_dimension_numbers<[2], [1], [1], [2], [0, 0, 0, 1, 1, 2], [0], [0]>} : vector<2x8x8xf32>, vector<2x8x8xf32>, vector<2x8x8xf32> -> vector<2x8x8xf32>
    %83 = vector.extract_strided_slice %2 {offsets = [16, 0], sizes = [8, 32], strides = [1, 1]} : vector<32x32xf32> to vector<8x32xf32>
    %cst_28 = arith.constant dense<0.000000e+00> : vector<2x8x32xf32>
    %84 = tpu.matmul %82, %83, %cst_28 {dimension_numbers = #tpu.dot_dimension_numbers<[2], [0], [0, 1], [1], [0, 0, 0, 1, 1, 1], [], []>} : vector<2x8x8xf32>, vector<8x32xf32>, vector<2x8x32xf32> -> vector<2x8x32xf32>
    %85 = arith.addf %61, %84 : vector<2x8x32xf32>
    %86 = vector.extract_strided_slice %5 {offsets = [0, 0, 24], sizes = [2, 8, 8], strides = [1, 1, 1]} : vector<2x8x32xf32> to vector<2x8x8xf32>
    %87 = vector.extract_strided_slice %6 {offsets = [0, 0, 24], sizes = [2, 8, 8], strides = [1, 1, 1]} : vector<2x8x32xf32> to vector<2x8x8xf32>
    %88 = vector.extract_strided_slice %7 {offsets = [0, 0, 24], sizes = [2, 8, 8], strides = [1, 1, 1]} : vector<2x8x32xf32> to vector<2x8x8xf32>
    %cst_29 = arith.constant dense<0.000000e+00> : vector<2x8x8xf32>
    %89 = tpu.matmul %86, %87, %cst_29 {dimension_numbers = #tpu.dot_dimension_numbers<[2], [2], [1], [1], [0, 0, 0, 1, 1, 1], [0], [0]>} : vector<2x8x8xf32>, vector<2x8x8xf32>, vector<2x8x8xf32> -> vector<2x8x8xf32>
    %90 = vector.broadcast %12 : f32 to vector<2x8x8xf32>
    %91 = arith.mulf %89, %90 : vector<2x8x8xf32>
    %cst_30 = arith.constant 0xFF800000 : f32
    %92 = vector.shape_cast %11 : vector<1x8x8xi1> to vector<1x8x8xi1>
    %93 = vector.broadcast %92 : vector<1x8x8xi1> to vector<2x8x8xi1>
    %94 = vector.broadcast %cst_30 : f32 to vector<2x8x8xf32>
    %95 = arith.select %93, %91, %94 : vector<2x8x8xi1>, vector<2x8x8xf32>
    %cst_31 = arith.constant dense<0xFF800000> : vector<2x8xf32>
    %96 = vector.multi_reduction <maximumf>, %95, %cst_31 [2] : vector<2x8x8xf32> to vector<2x8xf32>
    %97 = vector.shape_cast %96 : vector<2x8xf32> to vector<2x8x1xf32>
    %98 = vector.broadcast %97 : vector<2x8x1xf32> to vector<2x8x8xf32>
    %99 = arith.subf %95, %98 : vector<2x8x8xf32>
    %100 = math.exp %99 : vector<2x8x8xf32>
    %cst_32 = arith.constant dense<0.000000e+00> : vector<2x8xf32>
    %101 = vector.multi_reduction <add>, %100, %cst_32 [2] : vector<2x8x8xf32> to vector<2x8xf32>
    %102 = vector.shape_cast %101 : vector<2x8xf32> to vector<2x8x1xf32>
    %103 = tpu.reciprocal %102 {approx = true} : vector<2x8x1xf32> -> vector<2x8x1xf32>
    %104 = vector.broadcast %103 : vector<2x8x1xf32> to vector<2x8x8xf32>
    %105 = arith.mulf %100, %104 : vector<2x8x8xf32>
    %cst_33 = arith.constant dense<0.000000e+00> : vector<2x8x8xf32>
    %106 = tpu.matmul %105, %88, %cst_33 {dimension_numbers = #tpu.dot_dimension_numbers<[2], [1], [1], [2], [0, 0, 0, 1, 1, 2], [0], [0]>} : vector<2x8x8xf32>, vector<2x8x8xf32>, vector<2x8x8xf32> -> vector<2x8x8xf32>
    %107 = vector.extract_strided_slice %2 {offsets = [24, 0], sizes = [8, 32], strides = [1, 1]} : vector<32x32xf32> to vector<8x32xf32>
    %cst_34 = arith.constant dense<0.000000e+00> : vector<2x8x32xf32>
    %108 = tpu.matmul %106, %107, %cst_34 {dimension_numbers = #tpu.dot_dimension_numbers<[2], [0], [0, 1], [1], [0, 0, 0, 1, 1, 1], [], []>} : vector<2x8x8xf32>, vector<8x32xf32>, vector<2x8x32xf32> -> vector<2x8x32xf32>
    %109 = arith.addf %85, %108 : vector<2x8x32xf32>
    %110 = vector.shape_cast %3 : vector<1x32xf32> to vector<1x1x32xf32>
    %111 = vector.broadcast %110 : vector<1x1x32xf32> to vector<2x8x32xf32>
    %112 = arith.addf %109, %111 : vector<2x8x32xf32>
    %c0_35 = arith.constant 0 : index
    %c0_36 = arith.constant 0 : index
    %c0_37 = arith.constant 0 : index
    %113 = vector.load %arg4[%c0_35, %c0_36, %c0_37] : memref<2x8x32xf32, #tpu.memory_space<vmem>>, vector<2x8x32xf32>
    tpu.vector_store %arg4[%c0_35, %c0_36, %c0_37], %112 {strides = array<i32>} : memref<2x8x32xf32, #tpu.memory_space<vmem>>, vector<2x8x32xf32>,
    return
  }
}

</mosaic_0001>

<llo_original>
// kernel: tpu_custom_call.1
$region0: #{tpu_custom_call.1}
  #allocation0 [shape = 'u32[]', space=smem, size = 0x4, offset = 0x4, fixed_abs, tag = 'smem constant byte address 0x4 - core index']
  #allocation1 [shape = 'u32[72,128]{1,0:T(1,128)}', space=vmem, size = 0x9000, scoped, tag = 'internal scratch']
  %s0 = inlined_call_operand.hbm [shape: f32[2,8,32], index: 0, kind: input, shape index: {}]
  %s1 = inlined_call_operand.hbm [shape: f32[32,96], index: 1, kind: input, shape index: {}]
  %s2 = inlined_call_operand.hbm [shape: f32[32,32], index: 2, kind: input, shape index: {}]
  %s3 = inlined_call_operand.vmem [shape: f32[1,32], index: 3, kind: input, shape index: {}]
  %s4 = inlined_call_operand.hbm [shape: f32[2,8,32], index: 4, kind: output, shape index: {}]
  %s5 = sld [smem:[#allocation0]]
  $region38: #{tpu_custom_call.1} parent=0
    _
  %s7 = ssub.s32 1, %s5
  %s8 = scalar_select 0, %s7, %s5
  $region1: #{tpu_custom_call.1} parent=0
    #allocation2 [shape = 'u8[8192]{0}', space=vmem, size = 0x2000, scoped, tag = 'input window, operand 0, single buffered']
    #allocation3 [shape = 's32[1]{0}', space=sflag, size = 0x4, scoped, tag = 'scoped memory for tpu_custom_call.1']
    #allocation4 [shape = 's32[1]{0}', space=sflag, size = 0x4, scoped, tag = 'scoped memory for tpu_custom_call.1']
    #allocation5 [shape = 'u8[16384]{0}', space=vmem, size = 0x4000, scoped, tag = 'input window, operand 1, single buffered']
    #allocation6 [shape = 's32[1]{0}', space=sflag, size = 0x4, scoped, tag = 'scoped memory for tpu_custom_call.1']
    #allocation7 [shape = 'u8[16384]{0}', space=vmem, size = 0x4000, scoped, tag = 'input window, operand 2, single buffered']
    #allocation8 [shape = 'u8[8192]{0}', space=vmem, size = 0x2000, scoped, tag = 'output window, operand 0, single buffered']
    %9 = vsyncpa [#allocation3], 0
    %10 = vsyncpa [#allocation6], 0
    %11 = vsyncpa [#allocation4], 0
    // Predicated region
    $region2: #{tpu_custom_call.1} parent=1 // pred_check
      _
    $region3: #{tpu_custom_call.1} parent=1 // pred_check_branch
      %13 = sbr.rel (0) target = $region5
    $region4: #{tpu_custom_call.1} parent=1 // pred_region
      %15 = vsyncadd [#allocation3], 0
      %s16 = sshll.u32 %s0, 4
      %s17 = int_to_ptr.hbm [resolvable:$true] %s16
      %s18 = sshll.u32 [#allocation2], 4
      %s19 = int_to_ptr.vmem [resolvable:$true] %s18
      %24 = dma.hbm_to_vmem [thread:$0]  %s17, 256, %s19, [#allocation3], 128, 128, 8
    $region5: #{tpu_custom_call.1} parent=1 // pred_fallthru
      _
    // Predicated region
    $region6: #{tpu_custom_call.1} parent=1 // pred_check
      _
    $region7: #{tpu_custom_call.1} parent=1 // pred_check_branch
      %26 = sbr.rel (0) target = $region9
    $region8: #{tpu_custom_call.1} parent=1 // pred_region
      %28 = vsyncadd [#allocation6], 0
      %s29 = sshll.u32 %s1, 4
      %s30 = int_to_ptr.hbm [resolvable:$true] %s29
      %s31 = sshll.u32 [#allocation5], 4
      %s32 = int_to_ptr.vmem [resolvable:$true] %s31
      %37 = dma.hbm_to_vmem [thread:$0]  %s30, 512, %s32, [#allocation6], 128, 128, 8
    $region9: #{tpu_custom_call.1} parent=1 // pred_fallthru
      _
    // Predicated region
    $region10: #{tpu_custom_call.1} parent=1 // pred_check
      _
    $region11: #{tpu_custom_call.1} parent=1 // pred_check_branch
      %39 = sbr.rel (0) target = $region13
    $region12: #{tpu_custom_call.1} parent=1 // pred_region
      %41 = vsyncadd [#allocation6], 0
      %s42 = sshll.u32 %s2, 4
      %s43 = int_to_ptr.hbm [resolvable:$true] %s42
      %s44 = sshll.u32 [#allocation7], 4
      %s45 = int_to_ptr.vmem [resolvable:$true] %s44
      %50 = dma.hbm_to_vmem [thread:$0]  %s43, 512, %s45, [#allocation6], 128, 128, 8
    $region13: #{tpu_custom_call.1} parent=1 // pred_fallthru
      _
    // Predicated region
    $region14: #{tpu_custom_call.1} parent=1 // pred_check
      _
    $region15: #{tpu_custom_call.1} parent=1 // pred_check_branch
      %52 = sbr.rel (0) target = $region17
    $region16: #{tpu_custom_call.1} parent=1 // pred_region
      _
    $region17: #{tpu_custom_call.1} parent=1 // pred_fallthru
      _
    // Predicated region
    $region18: #{tpu_custom_call.1} parent=1 // pred_check
      _
    $region19: #{tpu_custom_call.1} parent=1 // pred_check_branch
      %54 = sbr.rel (0) target = $region21
    $region20: #{tpu_custom_call.1} parent=1 // pred_region
      %56 = dma.done [#allocation3], 256
    $region21: #{tpu_custom_call.1} parent=1 // pred_fallthru
      _
    // Predicated region
    $region22: #{tpu_custom_call.1} parent=1 // pred_check
      _
    $region23: #{tpu_custom_call.1} parent=1 // pred_check_branch
      %58 = sbr.rel (0) target = $region25
    $region24: #{tpu_custom_call.1} parent=1 // pred_region
      %60 = dma.done [#allocation6], 512
    $region25: #{tpu_custom_call.1} parent=1 // pred_fallthru
      _
    // Predicated region
    $region26: #{tpu_custom_call.1} parent=1 // pred_check
      _
    $region27: #{tpu_custom_call.1} parent=1 // pred_check_branch
      %62 = sbr.rel (0) target = $region29
    $region28: #{tpu_custom_call.1} parent=1 // pred_region
      %64 = dma.done [#allocation6], 512
    $region29: #{tpu_custom_call.1} parent=1 // pred_fallthru
      _
    %v65 = vld [vmem:[#allocation2] sm:$0xff]
    %v66 = vld [vmem:[#allocation2 + $0x8] sm:$0xff]
    %v67 = vld [vmem:[#allocation5] sm:$0xff]
    %v68 = vld [vmem:[#allocation5 + $0x8] sm:$0xff]
    %v69 = vld [vmem:[#allocation5 + $0x10] sm:$0xff]
    %v70 = vld [vmem:[#allocation5 + $0x18] sm:$0xff]
    %v71 = vld [vmem:[#allocation7] sm:$0xff]
    %v72 = vld [vmem:[#allocation7 + $0x8] sm:$0xff]
    %v73 = vld [vmem:[#allocation7 + $0x10] sm:$0xff]
    %v74 = vld [vmem:[#allocation7 + $0x18] sm:$0xff]
    %v75 = vld [vmem:[%s3] sm:$0x1]
    %vm76 = vcmask 261120
    %v78 = vsel %vm76, %v65, 0
    %v81 = vsel %vm76, %v66, 0
    %83 = vmatpush.msra.mxu0 0.0
    %84 = vmatpush.msra.mxu0 0.0
    %85 = vmatpush.msra.mxu0 0.0
    %86 = vmatpush.msra.mxu0 0.0
    %87 = vmatpush.msra.mxu0 0.0
    %88 = vmatpush.msra.mxu0 0.0
    %89 = vmatpush.msra.mxu0 0.0
    %90 = vmatpush.msra.mxu0 0.0
    %91 = vmatpush.msra.mxu0 0.0
    %92 = vmatpush.msra.mxu0 0.0
    %93 = vmatpush.msra.mxu0 0.0
    %94 = vmatpush.msra.mxu0 0.0
    %95 = vmatpush.msra.mxu0 %v70
    %96 = vmatpush.msra.mxu0 %v69
    %97 = vmatpush.msra.mxu0 %v68
    %98 = vmatpush.msra.mxu0 %v67
    %99 = vmatmul.f32.gmra.mxu0 %v78
    %v100 = vpop.f32.mrf.mxu0
    %v101 = vadd.f32 0.0, %v100
    %102 = vmatmul.f32.gmra.mxu0 %v81
    %v103 = vpop.f32.mrf.mxu0
    %v104 = vadd.f32 0.0, %v103
    %105 = vdwg.mxu0
    %v106 = vlaneseq
    %v107 = vshrl.u32 %v106, 7
    %v108 = vlaneseq
    %v109 = vand.u32 %v108, 127
    %vm110 = vcmp.ge.s32.totalorder %v107, %v109
    %112 = vrot.lane.b32.xlu0 %v101, 96
    %v113 = vpop.permute.xlu0 %112
    %vm114 = vcmask 64512
    %v115 = vsel %vm114, %v101, 0
    %v117 = vsel %vm114, %v113, 0
    %119 = vmatpush.xpose.msra.mxu0 0.0
    %120 = vmatpush.xpose.msra.mxu0 0.0
    %121 = vmatpush.xpose.msra.mxu0 0.0
    %122 = vmatpush.xpose.msra.mxu0 0.0
    %123 = vmatpush.xpose.msra.mxu0 0.0
    %124 = vmatpush.xpose.msra.mxu0 0.0
    %125 = vmatpush.xpose.msra.mxu0 0.0
    %126 = vmatpush.xpose.msra.mxu0 0.0
    %127 = vmatpush.xpose.msra.mxu0 0.0
    %128 = vmatpush.xpose.msra.mxu0 0.0
    %129 = vmatpush.xpose.msra.mxu0 0.0
    %130 = vmatpush.xpose.msra.mxu0 0.0
    %131 = vmatpush.xpose.msra.mxu0 0.0
    %132 = vmatpush.xpose.msra.mxu0 0.0
    %133 = vmatpush.xpose.msra.mxu0 0.0
    %134 = vmatpush.xpose.msra.mxu0 %v117
    %135 = vmatmul.f32.gmra.mxu0 %v115
    %v136 = vpop.f32.mrf.mxu0
    %v137 = vadd.f32 0.0, %v136
    %138 = vdwg.mxu0
    %140 = vrot.lane.b32.xlu0 %v104, 96
    %v141 = vpop.permute.xlu0 %140
    %v142 = vsel %vm114, %v104, 0
    %v144 = vsel %vm114, %v141, 0
    %146 = vmatpush.xpose.msra.mxu0 0.0
    %147 = vmatpush.xpose.msra.mxu0 0.0
    %148 = vmatpush.xpose.msra.mxu0 0.0
    %149 = vmatpush.xpose.msra.mxu0 0.0
    %150 = vmatpush.xpose.msra.mxu0 0.0
    %151 = vmatpush.xpose.msra.mxu0 0.0
    %152 = vmatpush.xpose.msra.mxu0 0.0
    %153 = vmatpush.xpose.msra.mxu0 0.0
    %154 = vmatpush.xpose.msra.mxu0 0.0
    %155 = vmatpush.xpose.msra.mxu0 0.0
    %156 = vmatpush.xpose.msra.mxu0 0.0
    %157 = vmatpush.xpose.msra.mxu0 0.0
    %158 = vmatpush.xpose.msra.mxu0 0.0
    %159 = vmatpush.xpose.msra.mxu0 0.0
    %160 = vmatpush.xpose.msra.mxu0 0.0
    %161 = vmatpush.xpose.msra.mxu0 %v144
    %162 = vmatmul.f32.gmra.mxu0 %v142
    %v163 = vpop.f32.mrf.mxu0
    %v164 = vadd.f32 0.0, %v163
    %165 = vdwg.mxu0
    %v166 = vmul.f32 %v137, 0.35355338
    %v167 = vmul.f32 %v164, 0.35355338
    %v168 = vsel %vm110, 1, 0
    %vm169 = vcmp.eq.s32.totalorder %v168, 1
    %v170 = vsel %vm169, %v166, -inf
    %v171 = vsel %vm169, %v167, -inf
    %v172 = vsel %vm114, %v170, -inf
    %173 = vmax.xlane.f32.xlu0 %v172
    %v174 = vpop.xlane.xlu0 %173
    %v175 = vsel %vm114, %v171, -inf
    %176 = vmax.xlane.f32.xlu0 %v175
    %v177 = vpop.xlane.xlu0 %176
    %v178 = vsub.f32 %v170, %v174
    %v179 = vsub.f32 %v171, %v177
    %v180 = vmul.f32 %v178, 1.442695
    %v181 = vpow.pop %v180
    %v182 = vmul.f32 %v179, 1.442695
    %v183 = vpow.pop %v182
    %v184 = vsel %vm114, %v181, 0.0
    %185 = vadd.xlane.f32.xlu0 %v184
    %v186 = vpop.xlane.xlu0 %185
    %v187 = vsel %vm114, %v183, 0.0
    %188 = vadd.xlane.f32.xlu0 %v187
    %v189 = vpop.xlane.xlu0 %188
    %v190 = vrcp.pop %v186
    %v191 = vrcp.pop %v189
    %v192 = vmul.f32 %v181, %v190
    %v193 = vmul.f32 %v183, %v191
    %194 = vrot.lane.b32.xlu0 %v101, 64
    %v195 = vpop.permute.xlu0 %194
    %v198 = vsel %vm114, %v192, 0
    %200 = vmatpush.msra.mxu0 0.0
    %201 = vmatpush.msra.mxu0 0.0
    %202 = vmatpush.msra.mxu0 0.0
    %203 = vmatpush.msra.mxu0 0.0
    %204 = vmatpush.msra.mxu0 0.0
    %205 = vmatpush.msra.mxu0 0.0
    %206 = vmatpush.msra.mxu0 0.0
    %207 = vmatpush.msra.mxu0 0.0
    %208 = vmatpush.msra.mxu0 0.0
    %209 = vmatpush.msra.mxu0 0.0
    %210 = vmatpush.msra.mxu0 0.0
    %211 = vmatpush.msra.mxu0 0.0
    %212 = vmatpush.msra.mxu0 0.0
    %213 = vmatpush.msra.mxu0 0.0
    %214 = vmatpush.msra.mxu0 0.0
    %215 = vmatpush.msra.mxu0 %v195
    %216 = vmatmul.f32.gmra.mxu0 %v198
    %v217 = vpop.f32.mrf.mxu0
    %v218 = vadd.f32 0.0, %v217
    %219 = vdwg.mxu0
    %220 = vrot.lane.b32.xlu0 %v104, 64
    %v221 = vpop.permute.xlu0 %220
    %v224 = vsel %vm114, %v193, 0
    %226 = vmatpush.msra.mxu0 0.0
    %227 = vmatpush.msra.mxu0 0.0
    %228 = vmatpush.msra.mxu0 0.0
    %229 = vmatpush.msra.mxu0 0.0
    %230 = vmatpush.msra.mxu0 0.0
    %231 = vmatpush.msra.mxu0 0.0
    %232 = vmatpush.msra.mxu0 0.0
    %233 = vmatpush.msra.mxu0 0.0
    %234 = vmatpush.msra.mxu0 0.0
    %235 = vmatpush.msra.mxu0 0.0
    %236 = vmatpush.msra.mxu0 0.0
    %237 = vmatpush.msra.mxu0 0.0
    %238 = vmatpush.msra.mxu0 0.0
    %239 = vmatpush.msra.mxu0 0.0
    %240 = vmatpush.msra.mxu0 0.0
    %241 = vmatpush.msra.mxu0 %v221
    %242 = vmatmul.f32.gmra.mxu0 %v224
    %v243 = vpop.f32.mrf.mxu0
    %v244 = vadd.f32 0.0, %v243
    %245 = vdwg.mxu0
    %246 = vrot.lane.b32.xlu0 %v101, 120
    %v247 = vpop.permute.xlu0 %246
    %248 = vrot.lane.b32.xlu0 %v101, 88
    %v249 = vpop.permute.xlu0 %248
    %v250 = vsel %vm114, %v247, 0
    %v252 = vsel %vm114, %v249, 0
    %254 = vmatpush.xpose.msra.mxu0 0.0
    %255 = vmatpush.xpose.msra.mxu0 0.0
    %256 = vmatpush.xpose.msra.mxu0 0.0
    %257 = vmatpush.xpose.msra.mxu0 0.0
    %258 = vmatpush.xpose.msra.mxu0 0.0
    %259 = vmatpush.xpose.msra.mxu0 0.0
    %260 = vmatpush.xpose.msra.mxu0 0.0
    %261 = vmatpush.xpose.msra.mxu0 0.0
    %262 = vmatpush.xpose.msra.mxu0 0.0
    %263 = vmatpush.xpose.msra.mxu0 0.0
    %264 = vmatpush.xpose.msra.mxu0 0.0
    %265 = vmatpush.xpose.msra.mxu0 0.0
    %266 = vmatpush.xpose.msra.mxu0 0.0
    %267 = vmatpush.xpose.msra.mxu0 0.0
    %268 = vmatpush.xpose.msra.mxu0 0.0
    %269 = vmatpush.xpose.msra.mxu0 %v252
    %270 = vmatmul.f32.gmra.mxu0 %v250
    %v271 = vpop.f32.mrf.mxu0
    %v272 = vadd.f32 0.0, %v271
    %273 = vdwg.mxu0
    %274 = vrot.lane.b32.xlu0 %v104, 120
    %v275 = vpop.permute.xlu0 %274
    %276 = vrot.lane.b32.xlu0 %v104, 88
    %v277 = vpop.permute.xlu0 %276
    %v278 = vsel %vm114, %v275, 0
    %v280 = vsel %vm114, %v277, 0
    %282 = vmatpush.xpose.msra.mxu0 0.0
    %283 = vmatpush.xpose.msra.mxu0 0.0
    %284 = vmatpush.xpose.msra.mxu0 0.0
    %285 = vmatpush.xpose.msra.mxu0 0.0
    %286 = vmatpush.xpose.msra.mxu0 0.0
    %287 = vmatpush.xpose.msra.mxu0 0.0
    %288 = vmatpush.xpose.msra.mxu0 0.0
    %289 = vmatpush.xpose.msra.mxu0 0.0
    %290 = vmatpush.xpose.msra.mxu0 0.0
    %291 = vmatpush.xpose.msra.mxu0 0.0
    %292 = vmatpush.xpose.msra.mxu0 0.0
    %293 = vmatpush.xpose.msra.mxu0 0.0
    %294 = vmatpush.xpose.msra.mxu0 0.0
    %295 = vmatpush.xpose.msra.mxu0 0.0
    %296 = vmatpush.xpose.msra.mxu0 0.0
    %297 = vmatpush.xpose.msra.mxu0 %v280
    %298 = vmatmul.f32.gmra.mxu0 %v278
    %v299 = vpop.f32.mrf.mxu0
    %v300 = vadd.f32 0.0, %v299
    %301 = vdwg.mxu0
    %v302 = vmul.f32 %v272, 0.35355338
    %v303 = vmul.f32 %v300, 0.35355338
    %v304 = vsel %vm169, %v302, -inf
    %v305 = vsel %vm169, %v303, -inf
    %v306 = vsel %vm114, %v304, -inf
    %307 = vmax.xlane.f32.xlu0 %v306
    %v308 = vpop.xlane.xlu0 %307
    %v309 = vsel %vm114, %v305, -inf
    %310 = vmax.xlane.f32.xlu0 %v309
    %v311 = vpop.xlane.xlu0 %310
    %v312 = vsub.f32 %v304, %v308
    %v313 = vsub.f32 %v305, %v311
    %v314 = vmul.f32 %v312, 1.442695
    %v315 = vpow.pop %v314
    %v316 = vmul.f32 %v313, 1.442695
    %v317 = vpow.pop %v316
    %v318 = vsel %vm114, %v315, 0.0
    %319 = vadd.xlane.f32.xlu0 %v318
    %v320 = vpop.xlane.xlu0 %319
    %v321 = vsel %vm114, %v317, 0.0
    %322 = vadd.xlane.f32.xlu0 %v321
    %v323 = vpop.xlane.xlu0 %322
    %v324 = vrcp.pop %v320
    %v325 = vrcp.pop %v323
    %v326 = vmul.f32 %v315, %v324
    %v327 = vmul.f32 %v317, %v325
    %328 = vrot.lane.b32.xlu0 %v101, 56
    %v329 = vpop.permute.xlu0 %328
    %v332 = vsel %vm114, %v326, 0
    %334 = vmatpush.msra.mxu0 0.0
    %335 = vmatpush.msra.mxu0 0.0
    %336 = vmatpush.msra.mxu0 0.0
    %337 = vmatpush.msra.mxu0 0.0
    %338 = vmatpush.msra.mxu0 0.0
    %339 = vmatpush.msra.mxu0 0.0
    %340 = vmatpush.msra.mxu0 0.0
    %341 = vmatpush.msra.mxu0 0.0
    %342 = vmatpush.msra.mxu0 0.0
    %343 = vmatpush.msra.mxu0 0.0
    %344 = vmatpush.msra.mxu0 0.0
    %345 = vmatpush.msra.mxu0 0.0
    %346 = vmatpush.msra.mxu0 0.0
    %347 = vmatpush.msra.mxu0 0.0
    %348 = vmatpush.msra.mxu0 0.0
    %349 = vmatpush.msra.mxu0 %v329
    %350 = vmatmul.f32.gmra.mxu0 %v332
    %v351 = vpop.f32.mrf.mxu0
    %v352 = vadd.f32 0.0, %v351
    %353 = vdwg.mxu0
    %354 = vrot.lane.b32.xlu0 %v104, 56
    %v355 = vpop.permute.xlu0 %354
    %v358 = vsel %vm114, %v327, 0
    %360 = vmatpush.msra.mxu0 0.0
    %361 = vmatpush.msra.mxu0 0.0
    %362 = vmatpush.msra.mxu0 0.0
    %363 = vmatpush.msra.mxu0 0.0
    %364 = vmatpush.msra.mxu0 0.0
    %365 = vmatpush.msra.mxu0 0.0
    %366 = vmatpush.msra.mxu0 0.0
    %367 = vmatpush.msra.mxu0 0.0
    %368 = vmatpush.msra.mxu0 0.0
    %369 = vmatpush.msra.mxu0 0.0
    %370 = vmatpush.msra.mxu0 0.0
    %371 = vmatpush.msra.mxu0 0.0
    %372 = vmatpush.msra.mxu0 0.0
    %373 = vmatpush.msra.mxu0 0.0
    %374 = vmatpush.msra.mxu0 0.0
    %375 = vmatpush.msra.mxu0 %v355
    %376 = vmatmul.f32.gmra.mxu0 %v358
    %v377 = vpop.f32.mrf.mxu0
    %v378 = vadd.f32 0.0, %v377
    %379 = vdwg.mxu0
    %v381 = vsel %vm114, %v352, 0
    %v384 = vsel %vm114, %v378, 0
    %386 = vmatpush.msra.mxu0 0.0
    %387 = vmatpush.msra.mxu0 0.0
    %388 = vmatpush.msra.mxu0 0.0
    %389 = vmatpush.msra.mxu0 0.0
    %390 = vmatpush.msra.mxu0 0.0
    %391 = vmatpush.msra.mxu0 0.0
    %392 = vmatpush.msra.mxu0 0.0
    %393 = vmatpush.msra.mxu0 0.0
    %394 = vmatpush.msra.mxu0 0.0
    %395 = vmatpush.msra.mxu0 0.0
    %396 = vmatpush.msra.mxu0 0.0
    %397 = vmatpush.msra.mxu0 0.0
    %398 = vmatpush.msra.mxu0 0.0
    %399 = vmatpush.msra.mxu0 0.0
    %400 = vmatpush.msra.mxu0 0.0
    %401 = vmatpush.msra.mxu0 %v72
    %402 = vmatmul.f32.gmra.mxu0 %v381
    %v403 = vpop.f32.mrf.mxu0
    %v404 = vadd.f32 0.0, %v403
    %405 = vmatmul.f32.gmra.mxu0 %v384
    %v406 = vpop.f32.mrf.mxu0
    %v407 = vadd.f32 0.0, %v406
    %408 = vdwg.mxu0
    %v410 = vsel %vm114, %v218, 0
    %v413 = vsel %vm114, %v244, 0
    %415 = vmatpush.msra.mxu0 0.0
    %416 = vmatpush.msra.mxu0 0.0
    %417 = vmatpush.msra.mxu0 0.0
    %418 = vmatpush.msra.mxu0 0.0
    %419 = vmatpush.msra.mxu0 0.0
    %420 = vmatpush.msra.mxu0 0.0
    %421 = vmatpush.msra.mxu0 0.0
    %422 = vmatpush.msra.mxu0 0.0
    %423 = vmatpush.msra.mxu0 0.0
    %424 = vmatpush.msra.mxu0 0.0
    %425 = vmatpush.msra.mxu0 0.0
    %426 = vmatpush.msra.mxu0 0.0
    %427 = vmatpush.msra.mxu0 0.0
    %428 = vmatpush.msra.mxu0 0.0
    %429 = vmatpush.msra.mxu0 0.0
    %430 = vmatpush.msra.mxu0 %v71
    %431 = vmatmul.f32.gmra.mxu0 %v410
    %v432 = vpop.f32.mrf.mxu0
    %v433 = vadd.f32 %v404, %v432
    %434 = vmatmul.f32.gmra.mxu0 %v413
    %v435 = vpop.f32.mrf.mxu0
    %v436 = vadd.f32 %v407, %v435
    %437 = vdwg.mxu0
    %438 = vrot.lane.b32.xlu0 %v101, 112
    %v439 = vpop.permute.xlu0 %438
    %440 = vrot.lane.b32.xlu0 %v101, 80
    %v441 = vpop.permute.xlu0 %440
    %v442 = vsel %vm114, %v439, 0
    %v444 = vsel %vm114, %v441, 0
    %446 = vmatpush.xpose.msra.mxu0 0.0
    %447 = vmatpush.xpose.msra.mxu0 0.0
    %448 = vmatpush.xpose.msra.mxu0 0.0
    %449 = vmatpush.xpose.msra.mxu0 0.0
    %450 = vmatpush.xpose.msra.mxu0 0.0
    %451 = vmatpush.xpose.msra.mxu0 0.0
    %452 = vmatpush.xpose.msra.mxu0 0.0
    %453 = vmatpush.xpose.msra.mxu0 0.0
    %454 = vmatpush.xpose.msra.mxu0 0.0
    %455 = vmatpush.xpose.msra.mxu0 0.0
    %456 = vmatpush.xpose.msra.mxu0 0.0
    %457 = vmatpush.xpose.msra.mxu0 0.0
    %458 = vmatpush.xpose.msra.mxu0 0.0
    %459 = vmatpush.xpose.msra.mxu0 0.0
    %460 = vmatpush.xpose.msra.mxu0 0.0
    %461 = vmatpush.xpose.msra.mxu0 %v444
    %462 = vmatmul.f32.gmra.mxu0 %v442
    %v463 = vpop.f32.mrf.mxu0
    %v464 = vadd.f32 0.0, %v463
    %465 = vdwg.mxu0
    %466 = vrot.lane.b32.xlu0 %v104, 112
    %v467 = vpop.permute.xlu0 %466
    %468 = vrot.lane.b32.xlu0 %v104, 80
    %v469 = vpop.permute.xlu0 %468
    %v470 = vsel %vm114, %v467, 0
    %v472 = vsel %vm114, %v469, 0
    %474 = vmatpush.xpose.msra.mxu0 0.0
    %475 = vmatpush.xpose.msra.mxu0 0.0
    %476 = vmatpush.xpose.msra.mxu0 0.0
    %477 = vmatpush.xpose.msra.mxu0 0.0
    %478 = vmatpush.xpose.msra.mxu0 0.0
    %479 = vmatpush.xpose.msra.mxu0 0.0
    %480 = vmatpush.xpose.msra.mxu0 0.0
    %481 = vmatpush.xpose.msra.mxu0 0.0
    %482 = vmatpush.xpose.msra.mxu0 0.0
    %483 = vmatpush.xpose.msra.mxu0 0.0
    %484 = vmatpush.xpose.msra.mxu0 0.0
    %485 = vmatpush.xpose.msra.mxu0 0.0
    %486 = vmatpush.xpose.msra.mxu0 0.0
    %487 = vmatpush.xpose.msra.mxu0 0.0
    %488 = vmatpush.xpose.msra.mxu0 0.0
    %489 = vmatpush.xpose.msra.mxu0 %v472
    %490 = vmatmul.f32.gmra.mxu0 %v470
    %v491 = vpop.f32.mrf.mxu0
    %v492 = vadd.f32 0.0, %v491
    %493 = vdwg.mxu0
    %v494 = vmul.f32 %v464, 0.35355338
    %v495 = vmul.f32 %v492, 0.35355338
    %v496 = vsel %vm169, %v494, -inf
    %v497 = vsel %vm169, %v495, -inf
    %v498 = vsel %vm114, %v496, -inf
    %499 = vmax.xlane.f32.xlu0 %v498
    %v500 = vpop.xlane.xlu0 %499
    %v501 = vsel %vm114, %v497, -inf
    %502 = vmax.xlane.f32.xlu0 %v501
    %v503 = vpop.xlane.xlu0 %502
    %v504 = vsub.f32 %v496, %v500
    %v505 = vsub.f32 %v497, %v503
    %v506 = vmul.f32 %v504, 1.442695
    %v507 = vpow.pop %v506
    %v508 = vmul.f32 %v505, 1.442695
    %v509 = vpow.pop %v508
    %v510 = vsel %vm114, %v507, 0.0
    %511 = vadd.xlane.f32.xlu0 %v510
    %v512 = vpop.xlane.xlu0 %511
    %v513 = vsel %vm114, %v509, 0.0
    %514 = vadd.xlane.f32.xlu0 %v513
    %v515 = vpop.xlane.xlu0 %514
    %v516 = vrcp.pop %v512
    %v517 = vrcp.pop %v515
    %v518 = vmul.f32 %v507, %v516
    %v519 = vmul.f32 %v509, %v517
    %520 = vrot.lane.b32.xlu0 %v101, 48
    %v521 = vpop.permute.xlu0 %520
    %v524 = vsel %vm114, %v518, 0
    %526 = vmatpush.msra.mxu0 0.0
    %527 = vmatpush.msra.mxu0 0.0
    %528 = vmatpush.msra.mxu0 0.0
    %529 = vmatpush.msra.mxu0 0.0
    %530 = vmatpush.msra.mxu0 0.0
    %531 = vmatpush.msra.mxu0 0.0
    %532 = vmatpush.msra.mxu0 0.0
    %533 = vmatpush.msra.mxu0 0.0
    %534 = vmatpush.msra.mxu0 0.0
    %535 = vmatpush.msra.mxu0 0.0
    %536 = vmatpush.msra.mxu0 0.0
    %537 = vmatpush.msra.mxu0 0.0
    %538 = vmatpush.msra.mxu0 0.0
    %539 = vmatpush.msra.mxu0 0.0
    %540 = vmatpush.msra.mxu0 0.0
    %541 = vmatpush.msra.mxu0 %v521
    %542 = vmatmul.f32.gmra.mxu0 %v524
    %v543 = vpop.f32.mrf.mxu0
    %v544 = vadd.f32 0.0, %v543
    %545 = vdwg.mxu0
    %546 = vrot.lane.b32.xlu0 %v104, 48
    %v547 = vpop.permute.xlu0 %546
    %v550 = vsel %vm114, %v519, 0
    %552 = vmatpush.msra.mxu0 0.0
    %553 = vmatpush.msra.mxu0 0.0
    %554 = vmatpush.msra.mxu0 0.0
    %555 = vmatpush.msra.mxu0 0.0
    %556 = vmatpush.msra.mxu0 0.0
    %557 = vmatpush.msra.mxu0 0.0
    %558 = vmatpush.msra.mxu0 0.0
    %559 = vmatpush.msra.mxu0 0.0
    %560 = vmatpush.msra.mxu0 0.0
    %561 = vmatpush.msra.mxu0 0.0
    %562 = vmatpush.msra.mxu0 0.0
    %563 = vmatpush.msra.mxu0 0.0
    %564 = vmatpush.msra.mxu0 0.0
    %565 = vmatpush.msra.mxu0 0.0
    %566 = vmatpush.msra.mxu0 0.0
    %567 = vmatpush.msra.mxu0 %v547
    %568 = vmatmul.f32.gmra.mxu0 %v550
    %v569 = vpop.f32.mrf.mxu0
    %v570 = vadd.f32 0.0, %v569
    %571 = vdwg.mxu0
    %v573 = vsel %vm114, %v544, 0
    %v576 = vsel %vm114, %v570, 0
    %578 = vmatpush.msra.mxu0 0.0
    %579 = vmatpush.msra.mxu0 0.0
    %580 = vmatpush.msra.mxu0 0.0
    %581 = vmatpush.msra.mxu0 0.0
    %582 = vmatpush.msra.mxu0 0.0
    %583 = vmatpush.msra.mxu0 0.0
    %584 = vmatpush.msra.mxu0 0.0
    %585 = vmatpush.msra.mxu0 0.0
    %586 = vmatpush.msra.mxu0 0.0
    %587 = vmatpush.msra.mxu0 0.0
    %588 = vmatpush.msra.mxu0 0.0
    %589 = vmatpush.msra.mxu0 0.0
    %590 = vmatpush.msra.mxu0 0.0
    %591 = vmatpush.msra.mxu0 0.0
    %592 = vmatpush.msra.mxu0 0.0
    %593 = vmatpush.msra.mxu0 %v73
    %594 = vmatmul.f32.gmra.mxu0 %v573
    %v595 = vpop.f32.mrf.mxu0
    %v596 = vadd.f32 0.0, %v595
    %597 = vmatmul.f32.gmra.mxu0 %v576
    %v598 = vpop.f32.mrf.mxu0
    %v599 = vadd.f32 0.0, %v598
    %600 = vdwg.mxu0
    %v601 = vadd.f32 %v433, %v596
    %v602 = vadd.f32 %v436, %v599
    %603 = vrot.lane.b32.xlu0 %v101, 104
    %v604 = vpop.permute.xlu0 %603
    %605 = vrot.lane.b32.xlu0 %v101, 72
    %v606 = vpop.permute.xlu0 %605
    %v607 = vsel %vm114, %v604, 0
    %v609 = vsel %vm114, %v606, 0
    %611 = vmatpush.xpose.msra.mxu0 0.0
    %612 = vmatpush.xpose.msra.mxu0 0.0
    %613 = vmatpush.xpose.msra.mxu0 0.0
    %614 = vmatpush.xpose.msra.mxu0 0.0
    %615 = vmatpush.xpose.msra.mxu0 0.0
    %616 = vmatpush.xpose.msra.mxu0 0.0
    %617 = vmatpush.xpose.msra.mxu0 0.0
    %618 = vmatpush.xpose.msra.mxu0 0.0
    %619 = vmatpush.xpose.msra.mxu0 0.0
    %620 = vmatpush.xpose.msra.mxu0 0.0
    %621 = vmatpush.xpose.msra.mxu0 0.0
    %622 = vmatpush.xpose.msra.mxu0 0.0
    %623 = vmatpush.xpose.msra.mxu0 0.0
    %624 = vmatpush.xpose.msra.mxu0 0.0
    %625 = vmatpush.xpose.msra.mxu0 0.0
    %626 = vmatpush.xpose.msra.mxu0 %v609
    %627 = vmatmul.f32.gmra.mxu0 %v607
    %v628 = vpop.f32.mrf.mxu0
    %v629 = vadd.f32 0.0, %v628
    %630 = vdwg.mxu0
    %631 = vrot.lane.b32.xlu0 %v104, 104
    %v632 = vpop.permute.xlu0 %631
    %633 = vrot.lane.b32.xlu0 %v104, 72
    %v634 = vpop.permute.xlu0 %633
    %v635 = vsel %vm114, %v632, 0
    %v637 = vsel %vm114, %v634, 0
    %639 = vmatpush.xpose.msra.mxu0 0.0
    %640 = vmatpush.xpose.msra.mxu0 0.0
    %641 = vmatpush.xpose.msra.mxu0 0.0
    %642 = vmatpush.xpose.msra.mxu0 0.0
    %643 = vmatpush.xpose.msra.mxu0 0.0
    %644 = vmatpush.xpose.msra.mxu0 0.0
    %645 = vmatpush.xpose.msra.mxu0 0.0
    %646 = vmatpush.xpose.msra.mxu0 0.0
    %647 = vmatpush.xpose.msra.mxu0 0.0
    %648 = vmatpush.xpose.msra.mxu0 0.0
    %649 = vmatpush.xpose.msra.mxu0 0.0
    %650 = vmatpush.xpose.msra.mxu0 0.0
    %651 = vmatpush.xpose.msra.mxu0 0.0
    %652 = vmatpush.xpose.msra.mxu0 0.0
    %653 = vmatpush.xpose.msra.mxu0 0.0
    %654 = vmatpush.xpose.msra.mxu0 %v637
    %655 = vmatmul.f32.gmra.mxu0 %v635
    %v656 = vpop.f32.mrf.mxu0
    %v657 = vadd.f32 0.0, %v656
    %658 = vdwg.mxu0
    %v659 = vmul.f32 %v629, 0.35355338
    %v660 = vmul.f32 %v657, 0.35355338
    %v661 = vsel %vm169, %v659, -inf
    %v662 = vsel %vm169, %v660, -inf
    %v663 = vsel %vm114, %v661, -inf
    %664 = vmax.xlane.f32.xlu0 %v663
    %v665 = vpop.xlane.xlu0 %664
    %v666 = vsel %vm114, %v662, -inf
    %667 = vmax.xlane.f32.xlu0 %v666
    %v668 = vpop.xlane.xlu0 %667
    %v669 = vsub.f32 %v661, %v665
    %v670 = vsub.f32 %v662, %v668
    %v671 = vmul.f32 %v669, 1.442695
    %v672 = vpow.pop %v671
    %v673 = vmul.f32 %v670, 1.442695
    %v674 = vpow.pop %v673
    %v675 = vsel %vm114, %v672, 0.0
    %676 = vadd.xlane.f32.xlu0 %v675
    %v677 = vpop.xlane.xlu0 %676
    %v678 = vsel %vm114, %v674, 0.0
    %679 = vadd.xlane.f32.xlu0 %v678
    %v680 = vpop.xlane.xlu0 %679
    %v681 = vrcp.pop %v677
    %v682 = vrcp.pop %v680
    %v683 = vmul.f32 %v672, %v681
    %v684 = vmul.f32 %v674, %v682
    %685 = vrot.lane.b32.xlu0 %v101, 40
    %v686 = vpop.permute.xlu0 %685
    %v689 = vsel %vm114, %v683, 0
    %691 = vmatpush.msra.mxu0 0.0
    %692 = vmatpush.msra.mxu0 0.0
    %693 = vmatpush.msra.mxu0 0.0
    %694 = vmatpush.msra.mxu0 0.0
    %695 = vmatpush.msra.mxu0 0.0
    %696 = vmatpush.msra.mxu0 0.0
    %697 = vmatpush.msra.mxu0 0.0
    %698 = vmatpush.msra.mxu0 0.0
    %699 = vmatpush.msra.mxu0 0.0
    %700 = vmatpush.msra.mxu0 0.0
    %701 = vmatpush.msra.mxu0 0.0
    %702 = vmatpush.msra.mxu0 0.0
    %703 = vmatpush.msra.mxu0 0.0
    %704 = vmatpush.msra.mxu0 0.0
    %705 = vmatpush.msra.mxu0 0.0
    %706 = vmatpush.msra.mxu0 %v686
    %707 = vmatmul.f32.gmra.mxu0 %v689
    %v708 = vpop.f32.mrf.mxu0
    %v709 = vadd.f32 0.0, %v708
    %710 = vdwg.mxu0
    %711 = vrot.lane.b32.xlu0 %v104, 40
    %v712 = vpop.permute.xlu0 %711
    %v715 = vsel %vm114, %v684, 0
    %717 = vmatpush.msra.mxu0 0.0
    %718 = vmatpush.msra.mxu0 0.0
    %719 = vmatpush.msra.mxu0 0.0
    %720 = vmatpush.msra.mxu0 0.0
    %721 = vmatpush.msra.mxu0 0.0
    %722 = vmatpush.msra.mxu0 0.0
    %723 = vmatpush.msra.mxu0 0.0
    %724 = vmatpush.msra.mxu0 0.0
    %725 = vmatpush.msra.mxu0 0.0
    %726 = vmatpush.msra.mxu0 0.0
    %727 = vmatpush.msra.mxu0 0.0
    %728 = vmatpush.msra.mxu0 0.0
    %729 = vmatpush.msra.mxu0 0.0
    %730 = vmatpush.msra.mxu0 0.0
    %731 = vmatpush.msra.mxu0 0.0
    %732 = vmatpush.msra.mxu0 %v712
    %733 = vmatmul.f32.gmra.mxu0 %v715
    %v734 = vpop.f32.mrf.mxu0
    %v735 = vadd.f32 0.0, %v734
    %736 = vdwg.mxu0
    %v738 = vsel %vm114, %v709, 0
    %v741 = vsel %vm114, %v735, 0
    %743 = vmatpush.msra.mxu0 0.0
    %744 = vmatpush.msra.mxu0 0.0
    %745 = vmatpush.msra.mxu0 0.0
    %746 = vmatpush.msra.mxu0 0.0
    %747 = vmatpush.msra.mxu0 0.0
    %748 = vmatpush.msra.mxu0 0.0
    %749 = vmatpush.msra.mxu0 0.0
    %750 = vmatpush.msra.mxu0 0.0
    %751 = vmatpush.msra.mxu0 0.0
    %752 = vmatpush.msra.mxu0 0.0
    %753 = vmatpush.msra.mxu0 0.0
    %754 = vmatpush.msra.mxu0 0.0
    %755 = vmatpush.msra.mxu0 0.0
    %756 = vmatpush.msra.mxu0 0.0
    %757 = vmatpush.msra.mxu0 0.0
    %758 = vmatpush.msra.mxu0 %v74
    %759 = vmatmul.f32.gmra.mxu0 %v738
    %v760 = vpop.f32.mrf.mxu0
    %v761 = vadd.f32 0.0, %v760
    %762 = vmatmul.f32.gmra.mxu0 %v741
    %v763 = vpop.f32.mrf.mxu0
    %v764 = vadd.f32 0.0, %v763
    %765 = vdwg.mxu0
    %v766 = vadd.f32 %v601, %v761
    %v767 = vadd.f32 %v602, %v764
    %v769 = vperm.slane %v75, 0
    %v771 = vadd.f32 %v766, %v769
    %v772 = vadd.f32 %v767, %v769
    %773 = vst.msk [vmem:[#allocation8] sm:$0xff] %vm76, %v771
    %774 = vst.msk [vmem:[#allocation8 + $0x8] sm:$0xff] %vm76, %v772
    // Predicated region
    $region30: #{tpu_custom_call.1} parent=1 // pred_check
      _
    $region31: #{tpu_custom_call.1} parent=1 // pred_check_branch
      %776 = sbr.rel (0) target = $region33
    $region32: #{tpu_custom_call.1} parent=1 // pred_region
      %778 = vsyncadd [#allocation4], 0
      %s779 = sshll.u32 [#allocation8], 4
      %s780 = int_to_ptr.vmem [resolvable:$true] %s779
      %s781 = sshll.u32 %s4, 4
      %s782 = int_to_ptr.hbm [resolvable:$true] %s781
      %787 = dma.vmem_to_hbm [thread:$0]  %s780, 256, %s782, [#allocation4], 128, 128, 8
    $region33: #{tpu_custom_call.1} parent=1 // pred_fallthru
      _
    // Predicated region
    $region34: #{tpu_custom_call.1} parent=1 // pred_check
      _
    $region35: #{tpu_custom_call.1} parent=1 // pred_check_branch
      %789 = sbr.rel (0) target = $region37
    $region36: #{tpu_custom_call.1} parent=1 // pred_region
      %791 = dma.done [#allocation4], 256
    $region37: #{tpu_custom_call.1} parent=1 // pred_fallthru
      _
    %792 = vsyncpa [#allocation3], 1
    %793 = vsyncpa [#allocation6], 1
    %794 = vsyncpa [#allocation4], 1

</llo_original>
